<compile_context>
chip_gen: v7x
topology: tpu7x:2x2x1
jax: 0.10.0
libtpu: 0.0.40
codegen_flags: <defaults>
</compile_context>

<pallas_src>
import functools

import jax
import jax.numpy as jnp
from jax.experimental import pallas as pl
from jax.experimental.pallas import tpu as pltpu

LAMBDA_IOU = 0.8
LAMBDA_L1 = 0.2
SMOOTH = 1.0

LANES = 128
DEFAULT_CHUNK_ROWS = 1024          # rows per in-kernel compute chunk (f32 temps ~0.5 MiB)
_F32_MIN = float(jnp.finfo(jnp.float32).min)   # sigmoid -> 0 exactly, (> 0) -> False


def _cdiv(a, b):
    return -(-a // b)


def _round_up(x, m):
    return ((x + m - 1) // m) * m


def _sublane_multiple(itemsize):
    # 8 for 32-bit, 16 for 16-bit, 32 for 8-bit element types.
    return max(8, 32 // max(1, min(int(itemsize), 4)))


def _input_buffer_budget_bytes():
    """Generation-aware VMEM byte budget for the double-buffered input blocks."""
    try:
        cap = pltpu.get_tpu_info().vmem_capacity_bytes
    except Exception:  # be conservative if the query is unavailable
        cap = 64 * 1024 * 1024
    # ~1/4 of VMEM for input pipeline buffers: 32 MiB on v5e/v6e, 16 MiB on v7x.
    return max(8 * 1024 * 1024, min(32 * 1024 * 1024, cap // 4))


def _partial_sums_kernel(pred_ref, targ_ref, inter_ref, union_ref, pos_ref, *,
                         rows, chunk_rows, mask_rows):
    """Accumulate per-(batch, split) partial sums into (1,1,8,LANES) output blocks.

    grid = (B, NS, NJ): B parallel, NS parallel (row split for multi-TensorCore
    chips when B is small/odd), NJ arbitrary (reduction over row tiles).
    """
    s = pl.program_id(1)
    j = pl.program_id(2)
    nj = pl.num_programs(2)

    # Per-(batch, split) accumulator init; output blocks stay VMEM-resident over j.
    @pl.when(j == 0)
    def _init():
        inter_ref[...] = jnp.zeros_like(inter_ref)
        union_ref[...] = jnp.zeros_like(union_ref)
        pos_ref[...] = jnp.zeros_like(pos_ref)

    tile_r = pred_ref.shape[1]
    n_chunks = tile_r // chunk_rows
    # Logical first row of this tile within the (rows, LANES) view of one batch.
    tile_row0 = (s * nj + j) * tile_r

    pred_v = pred_ref.at[0]        # (tile_r, LANES) view, no load
    targ_v = targ_ref.at[0]

    def fold8(x):
        # (chunk_rows, LANES) f32 -> (1,1,8,LANES): vreg-wise VPU adds only, no XLU.
        return jnp.sum(x.reshape(chunk_rows // 8, 8, LANES), axis=0).reshape(1, 1, 8, LANES)

    @pl.loop(0, n_chunks)
    def _chunk(c):
        start = pl.multiple_of(c * chunk_rows, chunk_rows)
        p = pred_v[pl.ds(start, chunk_rows), :].astype(jnp.float32)
        t = targ_v[pl.ds(start, chunk_rows), :].astype(jnp.float32)

        if mask_rows:
            row_idx = (tile_row0 + start) + jax.lax.broadcasted_iota(
                jnp.int32, (chunk_rows, LANES), 0)
            valid = row_idx < rows
            # Masked rows: sigmoid(p) == 0, (p > 0) == False, t == 0 -> contribute 0.
            p = jnp.where(valid, p, _F32_MIN)
            t = jnp.where(valid, t, 0.0)

        sig = jax.nn.sigmoid(p)                         # EUP
        inter = sig * t                                 # VPU
        union = (sig - inter) + t                       # == sig + t - inter
        pos = (p > 0.0).astype(jnp.float32)

        inter_ref[...] += fold8(inter)
        union_ref[...] += fold8(union)
        pos_ref[...] += fold8(pos)


def soft_iou_l1_norm_loss(pred, target, *, max_tile_r=None, chunk_rows=None):
    """pred, target: (B, C, H, W) float arrays (consumed in native dtype).

    Returns scalar float32 loss = 0.8 * soft-IoU loss + 0.2 * positive-logit fraction.
    """
    assert pred.shape == target.shape and pred.ndim == 4
    b, c, h, w = pred.shape
    n = c * h * w

    p_item = jnp.dtype(pred.dtype).itemsize
    t_item = jnp.dtype(target.dtype).itemsize
    sub = max(_sublane_multiple(p_item), _sublane_multiple(t_item))

    r = _cdiv(n, LANES)                 # 128-lane rows of real data per batch
    r_arr = _round_up(r, sub)           # row extent of the array handed to the kernel

    if chunk_rows is None:
        chunk_rows = DEFAULT_CHUNK_ROWS
    if max_tile_r is None:
        # 2 pipeline buffers x (pred + targ) x tile_r x LANES bytes <= budget.
        budget = _input_buffer_budget_bytes()
        max_tile_r = budget // (2 * LANES * (p_item + t_item))
    max_tile_r = max(int(max_tile_r), sub)

    chunk = _round_up(min(chunk_rows, r_arr, max_tile_r), sub)
    max_tile_r = max(chunk, (max_tile_r // chunk) * chunk)
    tile_r = min(max_tile_r, _round_up(r_arr, chunk))     # multiple of chunk (and sub)

    # Lane/sublane alignment: only pad (an extra HBM pass) when actually required.
    pred_flat = pred.reshape(b, n)
    targ_flat = target.reshape(b, n)
    n_arr = r_arr * LANES
    if n_arr != n:
        pad = n_arr - n
        pad_neg = float(jnp.finfo(pred_flat.dtype).min)  # sigmoid->0, (>0)->False
        pred_flat = jnp.pad(pred_flat, ((0, 0), (0, pad)), constant_values=pad_neg)
        targ_flat = jnp.pad(targ_flat, ((0, 0), (0, pad)), constant_values=0)
    pred3 = pred_flat.reshape(b, r_arr, LANES)
    targ3 = targ_flat.reshape(b, r_arr, LANES)

    nj_total = _cdiv(r_arr, tile_r)
    # Give both v7x TensorCores work when the batch axis alone cannot (B == 1 or odd).
    ns = 2 if (b % 2 == 1 and nj_total >= 2) else 1
    nj_inner = _cdiv(nj_total, ns)
    mask_rows = (ns * nj_inner * tile_r) != r_arr

    def in_index_map(i, s, j):
        blk = s * nj_inner + j
        # Clamp so a duplicated tail tile never DMAs out of bounds; its rows are
        # logically >= r_arr and get masked to zero in the kernel.
        return (i, jnp.minimum(blk, nj_total - 1), 0)

    in_spec = pl.BlockSpec((1, tile_r, LANES), in_index_map)
    part_spec = pl.BlockSpec((1, 1, 8, LANES), lambda i, s, j: (i, s, 0, 0))
    part_shape = jax.ShapeDtypeStruct((b, ns, 8, LANES), jnp.float32)

    vmem_limit = int(2 * tile_r * LANES * (p_item + t_item)   # double-buffered inputs
                     + 10 * chunk * LANES * 4                 # elementwise temporaries
                     + (8 << 20))                             # headroom
    vmem_limit = max(vmem_limit, 32 << 20)                    # stays well under v7x's 64 MiB

    kernel = functools.partial(_partial_sums_kernel, rows=r_arr, chunk_rows=chunk,
                               mask_rows=mask_rows)

    grid_spec = pltpu.PrefetchScalarGridSpec(
        num_scalar_prefetch=0,
        grid=(b, ns, nj_inner),
        in_specs=[in_spec, in_spec],
        out_specs=(part_spec, part_spec, part_spec),
    )

    inter_p, union_p, pos_p = pl.pallas_call(
        kernel,
        out_shape=(part_shape, part_shape, part_shape),
        grid_spec=grid_spec,
        compiler_params=pltpu.CompilerParams(
            dimension_semantics=("parallel", "parallel", "arbitrary"),
            vmem_limit_bytes=vmem_limit,
        ),
    )(pred3, targ3)

    # Tiny final combine outside the kernel (a few dozen flops on (B,NS,8,128) partials).
    inter_s = jnp.sum(inter_p, axis=(1, 2, 3))          # (B,)
    union_s = jnp.sum(union_p, axis=(1, 2, 3))          # (B,) == pred_sum+targ_sum-inter
    pos_total = jnp.sum(pos_p)
    iou = (inter_s + SMOOTH) / (union_s + SMOOTH)
    iouloss = 1.0 - jnp.mean(iou)
    l1loss = pos_total / float(b * n)                    # unpadded element count
    return LAMBDA_IOU * iouloss + LAMBDA_L1 * l1loss


def _reference(pred, target):
    """Pure-JAX reference mirroring the PyTorch module, for verification."""
    sig = jax.nn.sigmoid(pred.astype(jnp.float32))
    t = target.astype(jnp.float32)
    inter_sum = jnp.sum(sig * t, axis=(1, 2, 3))
    pred_sum = jnp.sum(sig, axis=(1, 2, 3))
    targ_sum = jnp.sum(t, axis=(1, 2, 3))
    iou = (inter_sum + SMOOTH) / (pred_sum + targ_sum - inter_sum + SMOOTH)
    iouloss = 1.0 - jnp.mean(iou)
    b, c, h, w = pred.shape
    l1loss = jnp.sum((pred > 0).astype(jnp.float32)) / (b * c * h * w)
    return LAMBDA_IOU * iouloss + LAMBDA_L1 * l1loss


if __name__ == "__main__":
    key = jax.random.PRNGKey(0)
    ks = jax.random.split(key, 10)

    def check(idx, p, t, tol=1e-5, **kw):
        loss = jax.block_until_ready(soft_iou_l1_norm_loss(p, t, **kw))
        ref = jax.block_until_ready(_reference(p, t))
        assert jnp.allclose(loss, ref, atol=tol, rtol=tol), (idx, loss, ref)

    # 1) lane/sublane aligned, single tile, no padding, no masking.
    p1 = jax.random.normal(ks[0], (2, 4, 16, 16), jnp.float32)
    t1 = jax.random.bernoulli(ks[1], 0.3, (2, 4, 16, 16)).astype(jnp.float32)
    check(1, p1, t1)

    # 2) non-aligned shape -> lane/sublane padding path (pad values contribute 0).
    p2 = jax.random.normal(ks[2], (2, 3, 10, 12), jnp.float32)
    t2 = jax.random.bernoulli(ks[3], 0.3, (2, 3, 10, 12)).astype(jnp.float32)
    check(2, p2, t2)

    # 3) B=1 -> 2-way row split across the parallel NS axis; multi-tile reduction.
    p3 = jax.random.normal(ks[4], (1, 4, 32, 32), jnp.float32)
    t3 = jax.random.bernoulli(ks[5], 0.3, (1, 4, 32, 32)).astype(jnp.float32)
    check(3, p3, t3, max_tile_r=8)

    # 4) odd number of row tiles with the 2-way split -> clamped + fully masked tail tile.
    p4 = jax.random.normal(ks[6], (1, 3, 32, 32), jnp.float32)
    t4 = jax.random.bernoulli(ks[7], 0.3, (1, 3, 32, 32)).astype(jnp.float32)
    check(4, p4, t4, max_tile_r=8)

    # 5) multi-chunk inner compute loop + multi-tile reduction.
    p5 = jax.random.normal(ks[8], (2, 4, 32, 32), jnp.float32)
    t5 = jax.random.bernoulli(ks[9], 0.3, (2, 4, 32, 32)).astype(jnp.float32)
    check(5, p5, t5, max_tile_r=16, chunk_rows=8)

    # 6) bf16 inputs (half the HBM traffic), f32 accumulation in-kernel.
    check(6, p5.astype(jnp.bfloat16), t5.astype(jnp.bfloat16), tol=2e-3)

    print("KERNEL_OK")
</pallas_src>

<mosaic_0001>
module attributes {stable_mosaic.version = 11 : i64} {
  func.func @_partial_sums_kernel(%arg0: i32, %arg1: i32, %arg2: i32, %arg3: memref<1x8x128xf32, #tpu.memory_space<vmem>>, %arg4: memref<1x8x128xf32, #tpu.memory_space<vmem>>, %arg5: memref<1x1x8x128xf32, #tpu.memory_space<vmem>>, %arg6: memref<1x1x8x128xf32, #tpu.memory_space<vmem>>, %arg7: memref<1x1x8x128xf32, #tpu.memory_space<vmem>>) attributes {dimension_semantics = [#tpu.dimension_semantics<parallel>, #tpu.dimension_semantics<parallel>, #tpu.dimension_semantics<arbitrary>], iteration_bounds = array<i64: 2, 1, 1>, scalar_prefetch = 0 : i64, scratch_operands = 0 : i64, tpu.core_type = #tpu.core_type<tc>, window_params = [{transform_indices = @transform_0, window_bounds = array<i64: 1, 8, 128>}, {transform_indices = @transform_1, window_bounds = array<i64: 1, 8, 128>}, {transform_indices = @transform_2, window_bounds = array<i64: 1, 1, 8, 128>}, {transform_indices = @transform_3, window_bounds = array<i64: 1, 1, 8, 128>}, {transform_indices = @transform_4, window_bounds = array<i64: 1, 1, 8, 128>}]} {
    %c0_i32 = arith.constant 0 : i32
    %0 = arith.cmpi eq, %arg2, %c0_i32 : i32
    %1 = arith.extui %0 : i1 to i32
    %c0_i32_0 = arith.constant 0 : i32
    %2 = arith.cmpi ne, %1, %c0_i32_0 : i32
    scf.if %2 {
      %cst_39 = arith.constant 0.000000e+00 : f32
      %45 = vector.broadcast %cst_39 : f32 to vector<1x1x8x128xf32>
      %c0_40 = arith.constant 0 : index
      %c0_41 = arith.constant 0 : index
      %c0_42 = arith.constant 0 : index
      %c0_43 = arith.constant 0 : index
      %46 = vector.load %arg5[%c0_40, %c0_41, %c0_42, %c0_43] : memref<1x1x8x128xf32, #tpu.memory_space<vmem>>, vector<1x1x8x128xf32>
      tpu.vector_store %arg5[%c0_40, %c0_41, %c0_42, %c0_43], %45 {strides = array<i32>} : memref<1x1x8x128xf32, #tpu.memory_space<vmem>>, vector<1x1x8x128xf32>,
      %cst_44 = arith.constant 0.000000e+00 : f32
      %47 = vector.broadcast %cst_44 : f32 to vector<1x1x8x128xf32>
      %c0_45 = arith.constant 0 : index
      %c0_46 = arith.constant 0 : index
      %c0_47 = arith.constant 0 : index
      %c0_48 = arith.constant 0 : index
      %48 = vector.load %arg6[%c0_45, %c0_46, %c0_47, %c0_48] : memref<1x1x8x128xf32, #tpu.memory_space<vmem>>, vector<1x1x8x128xf32>
      tpu.vector_store %arg6[%c0_45, %c0_46, %c0_47, %c0_48], %47 {strides = array<i32>} : memref<1x1x8x128xf32, #tpu.memory_space<vmem>>, vector<1x1x8x128xf32>,
      %cst_49 = arith.constant 0.000000e+00 : f32
      %49 = vector.broadcast %cst_49 : f32 to vector<1x1x8x128xf32>
      %c0_50 = arith.constant 0 : index
      %c0_51 = arith.constant 0 : index
      %c0_52 = arith.constant 0 : index
      %c0_53 = arith.constant 0 : index
      %50 = vector.load %arg7[%c0_50, %c0_51, %c0_52, %c0_53] : memref<1x1x8x128xf32, #tpu.memory_space<vmem>>, vector<1x1x8x128xf32>
      tpu.vector_store %arg7[%c0_50, %c0_51, %c0_52, %c0_53], %49 {strides = array<i32>} : memref<1x1x8x128xf32, #tpu.memory_space<vmem>>, vector<1x1x8x128xf32>,
    } else {
    }
    %c0_i32_1 = arith.constant 0 : i32
    %c0_i32_2 = arith.constant 0 : i32
    %c0_i32_3 = arith.constant 0 : i32
    %c1_i32 = arith.constant 1 : i32
    %3 = arith.muli %c0_i32_3, %c1_i32 : i32
    %c0_i32_4 = arith.constant 0 : i32
    %4 = arith.addi %c0_i32_4, %3 : i32
    %c8_i32 = arith.constant 8 : i32
    %5 = arith.muli %4, %c8_i32 : i32
    %6 = tpu.assume_multiple %5, 8 : i32
    %c0_i32_5 = arith.constant 0 : i32
    %c0_i32_6 = arith.constant 0 : i32
    %7 = tpu.memref_slice %arg3[%c0_i32_1, %c0_i32_5, %c0_i32_6] : memref<1x8x128xf32, #tpu.memory_space<vmem>> -> memref<1x8x128xf32, #tpu.memory_space<vmem>>
    %8 = tpu.memref_squeeze %7 : memref<1x8x128xf32, #tpu.memory_space<vmem>> -> memref<8x128xf32, #tpu.memory_space<vmem>>
    %9 = arith.index_cast %6 : i32 to index
    %c0 = arith.constant 0 : index
    %10 = vector.load %8[%9, %c0] : memref<8x128xf32, #tpu.memory_space<vmem>>, vector<8x128xf32>
    %c0_i32_7 = arith.constant 0 : i32
    %c0_i32_8 = arith.constant 0 : i32
    %11 = tpu.memref_slice %arg4[%c0_i32_2, %c0_i32_7, %c0_i32_8] : memref<1x8x128xf32, #tpu.memory_space<vmem>> -> memref<1x8x128xf32, #tpu.memory_space<vmem>>
    %12 = tpu.memref_squeeze %11 : memref<1x8x128xf32, #tpu.memory_space<vmem>> -> memref<8x128xf32, #tpu.memory_space<vmem>>
    %13 = arith.index_cast %6 : i32 to index
    %c0_9 = arith.constant 0 : index
    %14 = vector.load %12[%13, %c0_9] : memref<8x128xf32, #tpu.memory_space<vmem>>, vector<8x128xf32>
    %15 = arith.negf %10 : vector<8x128xf32>
    %16 = math.exp %15 : vector<8x128xf32>
    %cst = arith.constant 1.000000e+00 : f32
    %17 = vector.broadcast %cst : f32 to vector<8x128xf32>
    %18 = arith.addf %17, %16 : vector<8x128xf32>
    %19 = arith.divf %17, %18 : vector<8x128xf32>
    %20 = arith.mulf %19, %14 : vector<8x128xf32>
    %21 = arith.subf %19, %20 : vector<8x128xf32>
    %22 = arith.addf %21, %14 : vector<8x128xf32>
    %cst_10 = arith.constant 0.000000e+00 : f32
    %23 = vector.broadcast %cst_10 : f32 to vector<8x128xf32>
    %24 = arith.cmpf ogt, %10, %23 : vector<8x128xf32>
    %25 = arith.extui %24 : vector<8x128xi1> to vector<8x128xi32>
    %26 = arith.sitofp %25 : vector<8x128xi32> to vector<8x128xf32>
    %c0_11 = arith.constant 0 : index
    %c0_12 = arith.constant 0 : index
    %c0_13 = arith.constant 0 : index
    %c0_14 = arith.constant 0 : index
    %27 = vector.load %arg5[%c0_11, %c0_12, %c0_13, %c0_14] : memref<1x1x8x128xf32, #tpu.memory_space<vmem>>, vector<1x1x8x128xf32>
    %28 = vector.shape_cast %20 : vector<8x128xf32> to vector<1x8x128xf32>
    %cst_15 = arith.constant dense<0.000000e+00> : vector<8x128xf32>
    %29 = vector.multi_reduction <add>, %28, %cst_15 [0] : vector<1x8x128xf32> to vector<8x128xf32>
    %30 = vector.shape_cast %29 : vector<8x128xf32> to vector<1x1x8x128xf32>
    %31 = arith.addf %27, %30 : vector<1x1x8x128xf32>
    %c0_16 = arith.constant 0 : index
    %c0_17 = arith.constant 0 : index
    %c0_18 = arith.constant 0 : index
    %c0_19 = arith.constant 0 : index
    %32 = vector.load %arg5[%c0_16, %c0_17, %c0_18, %c0_19] : memref<1x1x8x128xf32, #tpu.memory_space<vmem>>, vector<1x1x8x128xf32>
    tpu.vector_store %arg5[%c0_16, %c0_17, %c0_18, %c0_19], %31 {strides = array<i32>} : memref<1x1x8x128xf32, #tpu.memory_space<vmem>>, vector<1x1x8x128xf32>,
    %c0_20 = arith.constant 0 : index
    %c0_21 = arith.constant 0 : index
    %c0_22 = arith.constant 0 : index
    %c0_23 = arith.constant 0 : index
    %33 = vector.load %arg6[%c0_20, %c0_21, %c0_22, %c0_23] : memref<1x1x8x128xf32, #tpu.memory_space<vmem>>, vector<1x1x8x128xf32>
    %34 = vector.shape_cast %22 : vector<8x128xf32> to vector<1x8x128xf32>
    %cst_24 = arith.constant dense<0.000000e+00> : vector<8x128xf32>
    %35 = vector.multi_reduction <add>, %34, %cst_24 [0] : vector<1x8x128xf32> to vector<8x128xf32>
    %36 = vector.shape_cast %35 : vector<8x128xf32> to vector<1x1x8x128xf32>
    %37 = arith.addf %33, %36 : vector<1x1x8x128xf32>
    %c0_25 = arith.constant 0 : index
    %c0_26 = arith.constant 0 : index
    %c0_27 = arith.constant 0 : index
    %c0_28 = arith.constant 0 : index
    %38 = vector.load %arg6[%c0_25, %c0_26, %c0_27, %c0_28] : memref<1x1x8x128xf32, #tpu.memory_space<vmem>>, vector<1x1x8x128xf32>
    tpu.vector_store %arg6[%c0_25, %c0_26, %c0_27, %c0_28], %37 {strides = array<i32>} : memref<1x1x8x128xf32, #tpu.memory_space<vmem>>, vector<1x1x8x128xf32>,
    %c0_29 = arith.constant 0 : index
    %c0_30 = arith.constant 0 : index
    %c0_31 = arith.constant 0 : index
    %c0_32 = arith.constant 0 : index
    %39 = vector.load %arg7[%c0_29, %c0_30, %c0_31, %c0_32] : memref<1x1x8x128xf32, #tpu.memory_space<vmem>>, vector<1x1x8x128xf32>
    %40 = vector.shape_cast %26 : vector<8x128xf32> to vector<1x8x128xf32>
    %cst_33 = arith.constant dense<0.000000e+00> : vector<8x128xf32>
    %41 = vector.multi_reduction <add>, %40, %cst_33 [0] : vector<1x8x128xf32> to vector<8x128xf32>
    %42 = vector.shape_cast %41 : vector<8x128xf32> to vector<1x1x8x128xf32>
    %43 = arith.addf %39, %42 : vector<1x1x8x128xf32>
    %c0_34 = arith.constant 0 : index
    %c0_35 = arith.constant 0 : index
    %c0_36 = arith.constant 0 : index
    %c0_37 = arith.constant 0 : index
    %44 = vector.load %arg7[%c0_34, %c0_35, %c0_36, %c0_37] : memref<1x1x8x128xf32, #tpu.memory_space<vmem>>, vector<1x1x8x128xf32>
    tpu.vector_store %arg7[%c0_34, %c0_35, %c0_36, %c0_37], %43 {strides = array<i32>} : memref<1x1x8x128xf32, #tpu.memory_space<vmem>>, vector<1x1x8x128xf32>,
    %c1_i32_38 = arith.constant 1 : i32
    return
  }
  func.func @transform_0(%arg0: i32, %arg1: i32, %arg2: i32) -> (i32, i32, i32) {
    %c1_i32 = arith.constant 1 : i32
    %0 = arith.muli %arg1, %c1_i32 : i32
    %1 = arith.addi %0, %arg2 : i32
    %c0_i32 = arith.constant 0 : i32
    %2 = arith.minsi %1, %c0_i32 : i32
    %c0_i32_0 = arith.constant 0 : i32
    %c0_i32_1 = arith.constant 0 : i32
    return %arg0, %2, %c0_i32_0 : i32, i32, i32
  }
  func.func @transform_1(%arg0: i32, %arg1: i32, %arg2: i32) -> (i32, i32, i32) {
    %c1_i32 = arith.constant 1 : i32
    %0 = arith.muli %arg1, %c1_i32 : i32
    %1 = arith.addi %0, %arg2 : i32
    %c0_i32 = arith.constant 0 : i32
    %2 = arith.minsi %1, %c0_i32 : i32
    %c0_i32_0 = arith.constant 0 : i32
    %c0_i32_1 = arith.constant 0 : i32
    return %arg0, %2, %c0_i32_0 : i32, i32, i32
  }
  func.func @transform_2(%arg0: i32, %arg1: i32, %arg2: i32) -> (i32, i32, i32, i32) {
    %c0_i32 = arith.constant 0 : i32
    %c0_i32_0 = arith.constant 0 : i32
    %c0_i32_1 = arith.constant 0 : i32
    return %arg0, %arg1, %c0_i32, %c0_i32_0 : i32, i32, i32, i32
  }
  func.func @transform_3(%arg0: i32, %arg1: i32, %arg2: i32) -> (i32, i32, i32, i32) {
    %c0_i32 = arith.constant 0 : i32
    %c0_i32_0 = arith.constant 0 : i32
    %c0_i32_1 = arith.constant 0 : i32
    return %arg0, %arg1, %c0_i32, %c0_i32_0 : i32, i32, i32, i32
  }
  func.func @transform_4(%arg0: i32, %arg1: i32, %arg2: i32) -> (i32, i32, i32, i32) {
    %c0_i32 = arith.constant 0 : i32
    %c0_i32_0 = arith.constant 0 : i32
    %c0_i32_1 = arith.constant 0 : i32
    return %arg0, %arg1, %c0_i32, %c0_i32_0 : i32, i32, i32, i32
  }
}

</mosaic_0001>

<llo_original>
// kernel: tpu_custom_call.1
$region0: #{tpu_custom_call.1}
  #allocation0 [shape = 'u32[]', space=smem, size = 0x4, offset = 0x4, fixed_abs, tag = 'smem constant byte address 0x4 - core index']
  #allocation1 [shape = 'u32[144,128]{1,0:T(1,128)}', space=vmem, size = 0x12000, scoped, tag = 'internal scratch']
  %s0 = inlined_call_operand.hbm [shape: f32[2,8,128], index: 0, kind: input, shape index: {}]
  %s1 = inlined_call_operand.hbm [shape: f32[2,8,128], index: 1, kind: input, shape index: {}]
  %s2 = inlined_call_operand.hbm [shape: f32[2,1,8,128], index: 2, kind: output, shape index: {0}]
  %s3 = inlined_call_operand.hbm [shape: f32[2,1,8,128], index: 3, kind: output, shape index: {1}]
  %s4 = inlined_call_operand.hbm [shape: f32[2,1,8,128], index: 4, kind: output, shape index: {2}]
  %5 = xla_tuple %s2, %s3, %s4
  %s6 = sld [smem:[#allocation0]]
  $region69: #{tpu_custom_call.1} parent=0
    _
  %s8 = ssub.s32 1, %s6
  %s9 = scalar_select 0, %s8, %s6
  $region1: #{tpu_custom_call.1} parent=0
    #allocation2 [shape = 'u8[8192]{0}', space=vmem, size = 0x2000, scoped, tag = 'input window, operand 0']
    #allocation3 [shape = 's32[2]{0}', space=sflag, size = 0x8, scoped, tag = 'scoped memory for tpu_custom_call.1']
    #allocation4 [shape = 's32[2]{0}', space=sflag, size = 0x8, scoped, tag = 'scoped memory for tpu_custom_call.1']
    #allocation5 [shape = 'u8[8192]{0}', space=vmem, size = 0x2000, scoped, tag = 'input window, operand 1']
    #allocation6 [shape = 's32[2]{0}', space=sflag, size = 0x8, scoped, tag = 'scoped memory for tpu_custom_call.1']
    #allocation7 [shape = 'u8[8192]{0}', space=vmem, size = 0x2000, scoped, tag = 'output window, operand 0']
    #allocation8 [shape = 'u8[8192]{0}', space=vmem, size = 0x2000, scoped, tag = 'output window, operand 1']
    #allocation9 [shape = 's32[2]{0}', space=sflag, size = 0x8, scoped, tag = 'scoped memory for tpu_custom_call.1']
    #allocation10 [shape = 'u8[8192]{0}', space=vmem, size = 0x2000, scoped, tag = 'output window, operand 2']
    %10 = vsyncpa [#allocation3], 0
    %s11 = scalar_lea.sflag [#allocation3], 1
    %12 = vsyncpa %s11, 0
    %13 = vsyncpa [#allocation6], 0
    %s14 = scalar_lea.sflag [#allocation6], 1
    %15 = vsyncpa %s14, 0
    %16 = vsyncpa [#allocation4], 0
    %s17 = scalar_lea.sflag [#allocation4], 1
    %18 = vsyncpa %s17, 0
    %19 = vsyncpa [#allocation9], 0
    %s20 = scalar_lea.sflag [#allocation9], 1
    %21 = vsyncpa %s20, 0
    loop: start=0, step=1, limit=4
    $region2: #{tpu_custom_call.1} parent=1 // loop_pre_header
      _
    $region3: #{tpu_custom_call.1} parent=1 // loop_header
      %s23 = sphi 0, %s27
      %p24 = scmp.ge.s32.totalorder %s23, 4
      %s30 = sphi 0, %s49
      %s31 = sphi 0, %s45
      %s32 = sphi 0, %s41
      %s33 = sphi 0, %s30
      %s34 = sphi 0, %s31
      %s35 = sphi 0, %s32
      %s36 = sphi 0, %s33
      %s37 = sphi 0, %s34
      %s38 = sphi 0, %s35
      %s60 = sphi 0, %s62
      %s63 = sphi 0, %s60
      %s64 = sphi 0, %s63
      %s80 = sphi 0, %s64
      %s94 = sphi 0, %s96
      %s97 = sphi 0, %s94
      %s98 = sphi 0, %s97
      %s114 = sphi 0, %s98
      %s122 = sphi 0, %s124
      %s125 = sphi 0, %s122
      %s126 = sphi 0, %s125
      %s142 = sphi 0, %s126
      %s150 = sphi 0, %s152
      %s153 = sphi 0, %s150
      %s154 = sphi 0, %s153
      %s170 = sphi 0, %s154
      %s178 = sphi 0, %s180
      %s181 = sphi 0, %s178
      %s182 = sphi 0, %s181
      %s198 = sphi 0, %s182
    $region4: #{tpu_custom_call.1} parent=1 // loop_header_branch
      %26 = sbr.rel (%p24) target = $region8
    $region5: #{tpu_custom_call.1} parent=1 // loop_body
      %s28 = ssub.s32 %s23, 1
      %s29 = ssub.s32 %s23, 2
      %s39 = sadd.s32 1, %s32
      %p40 = scmp.ge.s32.totalorder %s39, 1
      %s41 = scalar_select %p40, 0, %s39
      %s42 = sadd.s32 1, %s31
      %s43 = scalar_select %p40, %s42, %s31
      %p44 = scmp.ge.s32.totalorder %s43, 1
      %s45 = scalar_select %p44, 0, %s43
      %s46 = sadd.s32 1, %s30
      %s47 = scalar_select %p44, %s46, %s30
      %p48 = scmp.ge.s32.totalorder %s47, 2
      %s49 = scalar_select %p48, 0, %s47
      %s50 = sadd.s32 %s31, %s32
      %p51 = scmp.lt.s32.totalorder %s50, 0
      %s52 = scalar_select %p51, %s50, 0
      %s53 = sadd.s32 %s45, %s41
      %p54 = scmp.lt.s32.totalorder %s53, 0
      %s55 = scalar_select %p54, %s53, 0
      %s56 = ssub.s32 %s30, %s49
      %s57 = ssub.s32 %s52, %s55
      %s58 = sor.u32 %s56, %s57
      %p59 = scmp.eq.s32.totalorder %s58, 0
      %s61 = sadd.s32 %s60, 1
      %s62 = scalar_select %p59, %s60, %s61
      %p65 = pneg %p59
      %p66 = scmp.eq.s32.totalorder %s23, 1
      %p67 = por %p65, %p66
      %p68 = scmp.ne.s32.totalorder %s60, %s63
      %p69 = scmp.eq.s32.totalorder %s23, 0
      %p70 = por %p68, %p69
      %p71 = scmp.ne.s32.totalorder %s60, %s63
      %p72 = scmp.eq.s32.totalorder %s28, 1
      %p73 = por %p71, %p72
      %p74 = scmp.ne.s32.totalorder %s63, %s64
      %p75 = scmp.eq.s32.totalorder %s28, 0
      %p76 = por %p74, %p75
      %p77 = scmp.ne.s32.totalorder %s63, %s64
      %p78 = scmp.eq.s32.totalorder %s29, 1
      %p79 = por %p77, %p78
      %p81 = scmp.ne.s32.totalorder %s64, %s80
      %p82 = scmp.eq.s32.totalorder %s29, 0
      %p83 = por %p81, %p82
      %s84 = sadd.s32 %s31, %s32
      %p85 = scmp.lt.s32.totalorder %s84, 0
      %s86 = scalar_select %p85, %s84, 0
      %s87 = sadd.s32 %s45, %s41
      %p88 = scmp.lt.s32.totalorder %s87, 0
      %s89 = scalar_select %p88, %s87, 0
      %s90 = ssub.s32 %s30, %s49
      %s91 = ssub.s32 %s86, %s89
      %s92 = sor.u32 %s90, %s91
      %p93 = scmp.eq.s32.totalorder %s92, 0
      %s95 = sadd.s32 %s94, 1
      %s96 = scalar_select %p93, %s94, %s95
      %p99 = pneg %p93
      %p100 = scmp.eq.s32.totalorder %s23, 1
      %p101 = por %p99, %p100
      %p102 = scmp.ne.s32.totalorder %s94, %s97
      %p103 = scmp.eq.s32.totalorder %s23, 0
      %p104 = por %p102, %p103
      %p105 = scmp.ne.s32.totalorder %s94, %s97
      %p106 = scmp.eq.s32.totalorder %s28, 1
      %p107 = por %p105, %p106
      %p108 = scmp.ne.s32.totalorder %s97, %s98
      %p109 = scmp.eq.s32.totalorder %s28, 0
      %p110 = por %p108, %p109
      %p111 = scmp.ne.s32.totalorder %s97, %s98
      %p112 = scmp.eq.s32.totalorder %s29, 1
      %p113 = por %p111, %p112
      %p115 = scmp.ne.s32.totalorder %s98, %s114
      %p116 = scmp.eq.s32.totalorder %s29, 0
      %p117 = por %p115, %p116
      %s118 = ssub.s32 %s30, %s49
      %s119 = ssub.s32 %s31, %s45
      %s120 = sor.u32 %s118, %s119
      %p121 = scmp.eq.s32.totalorder %s120, 0
      %s123 = sadd.s32 %s122, 1
      %s124 = scalar_select %p121, %s122, %s123
      %p127 = pneg %p121
      %p128 = scmp.eq.s32.totalorder %s23, 1
      %p129 = por %p127, %p128
      %p130 = scmp.ne.s32.totalorder %s122, %s125
      %p131 = scmp.eq.s32.totalorder %s23, 0
      %p132 = por %p130, %p131
      %p133 = scmp.ne.s32.totalorder %s122, %s125
      %p134 = scmp.eq.s32.totalorder %s28, 1
      %p135 = por %p133, %p134
      %p136 = scmp.ne.s32.totalorder %s125, %s126
      %p137 = scmp.eq.s32.totalorder %s28, 0
      %p138 = por %p136, %p137
      %p139 = scmp.ne.s32.totalorder %s125, %s126
      %p140 = scmp.eq.s32.totalorder %s29, 1
      %p141 = por %p139, %p140
      %p143 = scmp.ne.s32.totalorder %s126, %s142
      %p144 = scmp.eq.s32.totalorder %s29, 0
      %p145 = por %p143, %p144
      %s146 = ssub.s32 %s30, %s49
      %s147 = ssub.s32 %s31, %s45
      %s148 = sor.u32 %s146, %s147
      %p149 = scmp.eq.s32.totalorder %s148, 0
      %s151 = sadd.s32 %s150, 1
      %s152 = scalar_select %p149, %s150, %s151
      %p155 = pneg %p149
      %p156 = scmp.eq.s32.totalorder %s23, 1
      %p157 = por %p155, %p156
      %p158 = scmp.ne.s32.totalorder %s150, %s153
      %p159 = scmp.eq.s32.totalorder %s23, 0
      %p160 = por %p158, %p159
      %p161 = scmp.ne.s32.totalorder %s150, %s153
      %p162 = scmp.eq.s32.totalorder %s28, 1
      %p163 = por %p161, %p162
      %p164 = scmp.ne.s32.totalorder %s153, %s154
      %p165 = scmp.eq.s32.totalorder %s28, 0
      %p166 = por %p164, %p165
      %p167 = scmp.ne.s32.totalorder %s153, %s154
      %p168 = scmp.eq.s32.totalorder %s29, 1
      %p169 = por %p167, %p168
      %p171 = scmp.ne.s32.totalorder %s154, %s170
      %p172 = scmp.eq.s32.totalorder %s29, 0
      %p173 = por %p171, %p172
      %s174 = ssub.s32 %s30, %s49
      %s175 = ssub.s32 %s31, %s45
      %s176 = sor.u32 %s174, %s175
      %p177 = scmp.eq.s32.totalorder %s176, 0
      %s179 = sadd.s32 %s178, 1
      %s180 = scalar_select %p177, %s178, %s179
      %p183 = pneg %p177
      %p184 = scmp.eq.s32.totalorder %s23, 1
      %p185 = por %p183, %p184
      %p186 = scmp.ne.s32.totalorder %s178, %s181
      %p187 = scmp.eq.s32.totalorder %s23, 0
      %p188 = por %p186, %p187
      %p189 = scmp.ne.s32.totalorder %s178, %s181
      %p190 = scmp.eq.s32.totalorder %s28, 1
      %p191 = por %p189, %p190
      %p192 = scmp.ne.s32.totalorder %s181, %s182
      %p193 = scmp.eq.s32.totalorder %s28, 0
      %p194 = por %p192, %p193
      %p195 = scmp.ne.s32.totalorder %s181, %s182
      %p196 = scmp.eq.s32.totalorder %s29, 1
      %p197 = por %p195, %p196
      %p199 = scmp.ne.s32.totalorder %s182, %s198
      %p200 = scmp.eq.s32.totalorder %s29, 0
      %p201 = por %p199, %p200
      %p202 = scmp.le.s32.totalorder 1, %s23
      %p203 = scmp.lt.s32.totalorder %s23, 3
      %p204 = pnand %p202, %p203
      %p205 = pneg %p204
      // Predicated region
      $region9: #{tpu_custom_call.1} parent=5 // pred_check
        _
      $region10: #{tpu_custom_call.1} parent=5 // pred_check_branch
        %207 = sbr.rel (%p204) target = $region12
      $region11: #{tpu_custom_call.1} parent=5 // pred_region
        %s208 = ssub.s32 %s23, 1
      $region12: #{tpu_custom_call.1} parent=5 // pred_fallthru
        _
      %p209 = scmp.lt.s32.totalorder %s23, 2
      // Predicated region
      $region13: #{tpu_custom_call.1} parent=5 // pred_check
        %p210 = pneg %p209
      $region14: #{tpu_custom_call.1} parent=5 // pred_check_branch
        %212 = sbr.rel (%p210) target = $region16
      $region15: #{tpu_custom_call.1} parent=5 // pred_region
        // Predicated region
        $region17: #{tpu_custom_call.1} parent=15 // pred_check
          %p213 = pneg %p70
        $region18: #{tpu_custom_call.1} parent=15 // pred_check_branch
          %215 = sbr.rel (%p213) target = $region20
        $region19: #{tpu_custom_call.1} parent=15 // pred_region
          %s216 = sand.u32 %s60, 1
          %s217 = scalar_lea.sflag [#allocation3], %s216
          %s218 = sand.u32 %s60, 1
          %s219 = smul.addr %s218, 8
          %s220 = scalar_lea.vmem [#allocation2], %s219
          %s221 = sadd.s32 %s31, %s32
          %p222 = scmp.lt.s32.totalorder %s221, 0
          %s223 = scalar_select %p222, %s221, 0
          %s225 = ssub.s32 128, 128
          %226 = vsyncadd %s217, %s225
          %s227 = sadd.s32 %s223, %s30
          %s228 = smul.addr %s227, 128
          %s229 = scalar_lea.hbm %s0, %s228
          %s231 = sshll.u32 %s220, 4
          %s232 = int_to_ptr.vmem [resolvable:$true] %s231
          %234 = dma.hbm_to_vmem [thread:$0]  %s229, 128, %s232, %s217
        $region20: #{tpu_custom_call.1} parent=15 // pred_fallthru
          _
        // Predicated region
        $region21: #{tpu_custom_call.1} parent=15 // pred_check
          %p235 = pneg %p104
        $region22: #{tpu_custom_call.1} parent=15 // pred_check_branch
          %237 = sbr.rel (%p235) target = $region24
        $region23: #{tpu_custom_call.1} parent=15 // pred_region
          %s238 = sand.u32 %s94, 1
          %s239 = scalar_lea.sflag [#allocation6], %s238
          %s240 = sand.u32 %s94, 1
          %s241 = smul.addr %s240, 8
          %s242 = scalar_lea.vmem [#allocation5], %s241
          %s243 = sadd.s32 %s31, %s32
          %p244 = scmp.lt.s32.totalorder %s243, 0
          %s245 = scalar_select %p244, %s243, 0
          %s247 = ssub.s32 128, 128
          %248 = vsyncadd %s239, %s247
          %s249 = sadd.s32 %s245, %s30
          %s250 = smul.addr %s249, 128
          %s251 = scalar_lea.hbm %s1, %s250
          %s253 = sshll.u32 %s242, 4
          %s254 = int_to_ptr.vmem [resolvable:$true] %s253
          %256 = dma.hbm_to_vmem [thread:$0]  %s251, 128, %s254, %s239
        $region24: #{tpu_custom_call.1} parent=15 // pred_fallthru
          _
      $region16: #{tpu_custom_call.1} parent=5 // pred_fallthru
        _
      %p257 = scmp.le.s32.totalorder 1, %s23
      %p258 = scmp.lt.s32.totalorder %s23, 3
      %p259 = pnand %p257, %p258
      %p260 = pneg %p259
      // Predicated region
      $region25: #{tpu_custom_call.1} parent=5 // pred_check
        _
      $region26: #{tpu_custom_call.1} parent=5 // pred_check_branch
        %262 = sbr.rel (%p259) target = $region28
      $region27: #{tpu_custom_call.1} parent=5 // pred_region
        %s263 = ssub.s32 %s23, 1
        %s264 = sand.u32 %s63, 1
        %s265 = scalar_lea.sflag [#allocation3], %s264
        %s266 = sand.u32 %s63, 1
        %s267 = smul.addr %s266, 8
        %s268 = scalar_lea.vmem [#allocation2], %s267
        // Predicated region
        $region29: #{tpu_custom_call.1} parent=27 // pred_check
          %p269 = pneg %p76
        $region30: #{tpu_custom_call.1} parent=27 // pred_check_branch
          %271 = sbr.rel (%p269) target = $region32
        $region31: #{tpu_custom_call.1} parent=27 // pred_region
          %272 = dma.done %s265, 128
        $region32: #{tpu_custom_call.1} parent=27 // pred_fallthru
          _
        %s273 = sand.u32 %s97, 1
        %s274 = scalar_lea.sflag [#allocation6], %s273
        %s275 = sand.u32 %s97, 1
        %s276 = smul.addr %s275, 8
        %s277 = scalar_lea.vmem [#allocation5], %s276
        // Predicated region
        $region33: #{tpu_custom_call.1} parent=27 // pred_check
          %p278 = pneg %p110
        $region34: #{tpu_custom_call.1} parent=27 // pred_check_branch
          %280 = sbr.rel (%p278) target = $region36
        $region35: #{tpu_custom_call.1} parent=27 // pred_region
          %281 = dma.done %s274, 128
        $region36: #{tpu_custom_call.1} parent=27 // pred_fallthru
          _
        %s282 = sand.u32 %s63, 1
        %s283 = scalar_lea.sflag [#allocation3], %s282
        %s284 = sand.u32 %s63, 1
        %s285 = smul.addr %s284, 8
        %s286 = scalar_lea.vmem [#allocation2], %s285
        %p287 = pneg %p76
        %p288 = pneg %p73
        %s289 = sand.u32 %s97, 1
        %s290 = scalar_lea.sflag [#allocation6], %s289
        %s291 = sand.u32 %s97, 1
        %s292 = smul.addr %s291, 8
        %s293 = scalar_lea.vmem [#allocation5], %s292
        %p294 = pneg %p110
        %p295 = pneg %p107
        %p296 = pneg %p138
        %p297 = pneg %p135
        %s298 = sand.u32 %s125, 1
        %s299 = scalar_lea.sflag [#allocation4], %s298
        %s300 = sand.u32 %s125, 1
        %s301 = smul.addr %s300, 8
        %s302 = scalar_lea.vmem [#allocation7], %s301
        %p303 = pneg %p166
        %p304 = pneg %p163
        %s305 = sand.u32 %s28, 1
        %s306 = scalar_lea.sflag [#allocation9], %s305
        %s307 = sand.u32 %s153, 1
        %s308 = smul.addr %s307, 8
        %s309 = scalar_lea.vmem [#allocation8], %s308
        %p310 = pneg %p194
        %p311 = pneg %p191
        %s312 = sand.u32 %s28, 1
        %s313 = scalar_lea.sflag [#allocation9], %s312
        %s314 = sand.u32 %s181, 1
        %s315 = smul.addr %s314, 8
        %s316 = scalar_lea.vmem [#allocation10], %s315
        %s317 = sadd.s32 %s34, %s35
        %p318 = scmp.lt.s32.totalorder %s317, 0
        %s319 = scalar_select %p318, %s317, 0
        %s320 = sadd.s32 %s34, %s35
        %p321 = scmp.lt.s32.totalorder %s320, 0
        %s322 = scalar_select %p321, %s320, 0
        %p323 = scmp.eq.s32.totalorder %s35, 0
        // Predicated region
        $region37: #{tpu_custom_call.1} parent=27 // pred_check
          %p324 = pneg %p323
        $region38: #{tpu_custom_call.1} parent=27 // pred_check_branch
          %326 = sbr.rel (%p324) target = $region40
        $region39: #{tpu_custom_call.1} parent=27 // pred_region
          %327 = vst [vmem:[%s302] sm:$0xff] 0.0
          %328 = vst [vmem:[%s309] sm:$0xff] 0.0
          %329 = vst [vmem:[%s316] sm:$0xff] 0.0
        $region40: #{tpu_custom_call.1} parent=27 // pred_fallthru
          _
        %v330 = vld [vmem:[%s268] sm:$0xff]
        %v331 = vld [vmem:[%s277] sm:$0xff]
        %v332 = vxor.u32 %v330, 2147483648
        %v333 = vmul.f32 %v332, 1.442695
        %v334 = vpow.pop %v333
        %v335 = vadd.f32 %v334, 1.0
        %v336 = vrcp.pop %v335
        %v337 = vmul.f32 1.0, %v336
        %v338 = vmul.f32 %v337, %v331
        %v339 = vsub.f32 %v337, %v338
        %v340 = vadd.f32 %v339, %v331
        %vm341 = vcmp.gt.f32.partialorder %v330, 0.0
        %v342 = vsel %vm341, 1, 0
        %v343 = vcvt.s32.f32 %v342
        %v344 = vld [vmem:[%s302] sm:$0xff]
        %v345 = vadd.f32 %v338, 0.0
        %v346 = vadd.f32 %v344, %v345
        %347 = vst [vmem:[%s302] sm:$0xff] %v346
        %v348 = vld [vmem:[%s309] sm:$0xff]
        %v349 = vadd.f32 %v340, 0.0
        %v350 = vadd.f32 %v348, %v349
        %351 = vst [vmem:[%s309] sm:$0xff] %v350
        %v352 = vld [vmem:[%s316] sm:$0xff]
        %v353 = vadd.f32 %v343, 0.0
        %v354 = vadd.f32 %v352, %v353
        %355 = vst [vmem:[%s316] sm:$0xff] %v354
        %s356 = sand.u32 %s125, 1
        %s357 = scalar_lea.sflag [#allocation4], %s356
        %s358 = sand.u32 %s125, 1
        %s359 = smul.addr %s358, 8
        %s360 = scalar_lea.vmem [#allocation7], %s359
        %s361 = sand.u32 %s28, 1
        %s362 = scalar_lea.sflag [#allocation9], %s361
        %s363 = sand.u32 %s153, 1
        %s364 = smul.addr %s363, 8
        %s365 = scalar_lea.vmem [#allocation8], %s364
        %s366 = sand.u32 %s28, 1
        %s367 = scalar_lea.sflag [#allocation9], %s366
        %s368 = sand.u32 %s181, 1
        %s369 = smul.addr %s368, 8
        %s370 = scalar_lea.vmem [#allocation10], %s369
        // Predicated region
        $region41: #{tpu_custom_call.1} parent=27 // pred_check
          %p371 = pneg %p135
        $region42: #{tpu_custom_call.1} parent=27 // pred_check_branch
          %373 = sbr.rel (%p371) target = $region44
        $region43: #{tpu_custom_call.1} parent=27 // pred_region
          %s375 = ssub.s32 128, 128
          %376 = vsyncadd %s357, %s375
          %s377 = sadd.s32 %s34, %s33
          %s378 = smul.addr %s377, 128
          %s379 = scalar_lea.hbm %s2, %s378
          %s381 = sshll.u32 %s360, 4
          %s382 = int_to_ptr.vmem [resolvable:$true] %s381
          %384 = dma.vmem_to_hbm [thread:$0]  %s382, 128, %s379, %s357
        $region44: #{tpu_custom_call.1} parent=27 // pred_fallthru
          _
        // Predicated region
        $region45: #{tpu_custom_call.1} parent=27 // pred_check
          %p385 = pneg %p163
        $region46: #{tpu_custom_call.1} parent=27 // pred_check_branch
          %387 = sbr.rel (%p385) target = $region48
        $region47: #{tpu_custom_call.1} parent=27 // pred_region
          %s389 = ssub.s32 128, 128
          %390 = vsyncadd %s362, %s389
          %s391 = sadd.s32 %s34, %s33
          %s392 = smul.addr %s391, 128
          %s393 = scalar_lea.hbm %s3, %s392
          %s395 = sshll.u32 %s365, 4
          %s396 = int_to_ptr.vmem [resolvable:$true] %s395
          %398 = dma.vmem_to_hbm [thread:$0]  %s396, 128, %s393, %s362
        $region48: #{tpu_custom_call.1} parent=27 // pred_fallthru
          _
        // Predicated region
        $region49: #{tpu_custom_call.1} parent=27 // pred_check
          %p399 = pneg %p191
        $region50: #{tpu_custom_call.1} parent=27 // pred_check_branch
          %401 = sbr.rel (%p399) target = $region52
        $region51: #{tpu_custom_call.1} parent=27 // pred_region
          %s403 = ssub.s32 128, 128
          %404 = vsyncadd %s367, %s403
          %s405 = sadd.s32 %s34, %s33
          %s406 = smul.addr %s405, 128
          %s407 = scalar_lea.hbm %s4, %s406
          %s409 = sshll.u32 %s370, 4
          %s410 = int_to_ptr.vmem [resolvable:$true] %s409
          %412 = dma.vmem_to_hbm [thread:$0]  %s410, 128, %s407, %s367
        $region52: #{tpu_custom_call.1} parent=27 // pred_fallthru
          _
      $region28: #{tpu_custom_call.1} parent=5 // pred_fallthru
        _
      %p413 = scmp.le.s32.totalorder 2, %s23
      // Predicated region
      $region53: #{tpu_custom_call.1} parent=5 // pred_check
        %p414 = pneg %p413
      $region54: #{tpu_custom_call.1} parent=5 // pred_check_branch
        %416 = sbr.rel (%p414) target = $region56
      $region55: #{tpu_custom_call.1} parent=5 // pred_region
        %s417 = ssub.s32 %s23, 2
        // Predicated region
        $region57: #{tpu_custom_call.1} parent=55 // pred_check
          %p418 = pneg %p141
        $region58: #{tpu_custom_call.1} parent=55 // pred_check_branch
          %420 = sbr.rel (%p418) target = $region60
        $region59: #{tpu_custom_call.1} parent=55 // pred_region
          %s421 = sand.u32 %s126, 1
          %s422 = scalar_lea.sflag [#allocation4], %s421
          %s423 = sand.u32 %s126, 1
          %s424 = smul.addr %s423, 8
          %s425 = scalar_lea.vmem [#allocation7], %s424
          %426 = dma.done %s422, 128
        $region60: #{tpu_custom_call.1} parent=55 // pred_fallthru
          _
        // Predicated region
        $region61: #{tpu_custom_call.1} parent=55 // pred_check
          %p427 = pneg %p169
        $region62: #{tpu_custom_call.1} parent=55 // pred_check_branch
          %429 = sbr.rel (%p427) target = $region64
        $region63: #{tpu_custom_call.1} parent=55 // pred_region
          %s430 = sand.u32 %s29, 1
          %s431 = scalar_lea.sflag [#allocation9], %s430
          %s432 = sand.u32 %s154, 1
          %s433 = smul.addr %s432, 8
          %s434 = scalar_lea.vmem [#allocation8], %s433
          %435 = dma.done %s431, 128
        $region64: #{tpu_custom_call.1} parent=55 // pred_fallthru
          _
        // Predicated region
        $region65: #{tpu_custom_call.1} parent=55 // pred_check
          %p436 = pneg %p197
        $region66: #{tpu_custom_call.1} parent=55 // pred_check_branch
          %438 = sbr.rel (%p436) target = $region68
        $region67: #{tpu_custom_call.1} parent=55 // pred_region
          %s439 = sand.u32 %s29, 1
          %s440 = scalar_lea.sflag [#allocation9], %s439
          %s441 = sand.u32 %s182, 1
          %s442 = smul.addr %s441, 8
          %s443 = scalar_lea.vmem [#allocation10], %s442
          %444 = dma.done %s440, 128
        $region68: #{tpu_custom_call.1} parent=55 // pred_fallthru
          _
      $region56: #{tpu_custom_call.1} parent=5 // pred_fallthru
        _
    $region6: #{tpu_custom_call.1} parent=1 // loop_footer
      %s27 = sadd.s32 1, %s23
    $region7: #{tpu_custom_call.1} parent=1 // loop_footer_branch
      %22 = sbr.rel target = $region3
    $region8: #{tpu_custom_call.1} parent=1 // loop_exit
      _
    %445 = vsyncpa [#allocation3], 1
    %s446 = scalar_lea.sflag [#allocation3], 1
    %447 = vsyncpa %s446, 1
    %448 = vsyncpa [#allocation6], 1
    %s449 = scalar_lea.sflag [#allocation6], 1
    %450 = vsyncpa %s449, 1
    %451 = vsyncpa [#allocation4], 1
    %s452 = scalar_lea.sflag [#allocation4], 1
    %453 = vsyncpa %s452, 1
    %454 = vsyncpa [#allocation9], 1
    %s455 = scalar_lea.sflag [#allocation9], 1
    %456 = vsyncpa %s455, 1

</llo_original>
